<compile_context>
chip_gen: v5e
topology: v5e:2x2
jax: 0.10.0
libtpu: 0.0.40
codegen_flags: <defaults>
</compile_context>

<pallas_src>
import functools

import jax
import jax.numpy as jnp
from jax.experimental import pallas as pl
from jax.experimental.pallas import tpu as pltpu


# ----------------------------------------------------------------------------
# Fused Pallas kernel (per row-tile of frames):
#   enc    = relu(frames @ Wenc + benc)                       (Conv1d, in_ch=1)
#   m1,m2  = sigmoid(enc @ [W1|W2] + [b1|b2])                 (fused 1x1 convs)
#   c[:, :K]  = (enc*m1) @ Wdec1                              (decoder taps, spk1)
#   c[:, K:]  = (enc*m2) @ Wdec2                              (decoder taps, spk2)
# Overlap-add + decoder scalar bias are applied outside (cheap data movement).
# ----------------------------------------------------------------------------
def _fused_kernel(frames_ref, wenc_ref, benc_ref, w12_ref, b12_ref,
                  wdec1_ref, wdec2_ref, c_ref):
    h = wenc_ref.shape[1]          # hidden size (128)
    k = wdec1_ref.shape[1]         # kernel_size (16)

    frames = frames_ref[...]                                           # [TN, K] bf16
    enc = jnp.dot(frames, wenc_ref[...],
                  preferred_element_type=jnp.float32)                  # f32 accum
    enc = jnp.maximum(enc + benc_ref[...], 0.0)                        # [TN, H] f32

    # Fused mask matmul: [TN, H] @ [H, 2H] -> [TN, 2H]
    pre = jnp.dot(enc.astype(jnp.bfloat16), w12_ref[...],
                  preferred_element_type=jnp.float32) + b12_ref[...]
    # sigmoid(x) == 0.5 * tanh(0.5 * x) + 0.5  (single EUP push per element)
    masks = 0.5 * jnp.tanh(0.5 * pre) + 0.5                            # [TN, 2H] f32

    d1 = (enc * masks[:, :h]).astype(jnp.bfloat16)                     # [TN, H]
    d2 = (enc * masks[:, h:]).astype(jnp.bfloat16)                     # [TN, H]

    c_ref[:, :k] = jnp.dot(d1, wdec1_ref[...],
                           preferred_element_type=jnp.float32)         # [TN, K]
    c_ref[:, k:] = jnp.dot(d2, wdec2_ref[...],
                           preferred_element_type=jnp.float32)         # [TN, K]


def _fused_pallas(frames, wenc, benc, w12, b12, wdec1, wdec2, *, tile_n):
    n, k = frames.shape
    h = wenc.shape[1]
    assert n % tile_n == 0

    full = lambda shp: pl.BlockSpec(shp, lambda i: (0, 0))   # resident across grid
    row = lambda shp: pl.BlockSpec(shp, lambda i: (i, 0))    # tiled along frames

    return pl.pallas_call(
        _fused_kernel,
        out_shape=jax.ShapeDtypeStruct((n, 2 * k), jnp.float32),
        grid_spec=pltpu.PrefetchScalarGridSpec(
            num_scalar_prefetch=0,
            grid=(n // tile_n,),
            in_specs=[row((tile_n, k)),        # frames (bf16)
                      full((k, h)),            # Wenc   (bf16)
                      full((1, h)),            # benc   (f32)
                      full((h, 2 * h)),        # [W1|W2] (bf16)
                      full((1, 2 * h)),        # [b1|b2] (f32)
                      full((h, k)),            # Wdec1  (bf16)
                      full((h, k))],           # Wdec2  (bf16)
            out_specs=row((tile_n, 2 * k)),    # packed decoder taps (f32)
        ),
        compiler_params=pltpu.CompilerParams(
            dimension_semantics=("parallel",)),
    )(frames, wenc, benc, w12, b12, wdec1, wdec2)


def _choose_tiling(n, max_tile=512):
    """Pick a row tile: big for large N, but keep >=2 grid steps when possible
    (v7x has 2 TensorCores). Tile is a multiple of 8; N is padded to a multiple."""
    if n >= 2 * max_tile:
        tile = max_tile
    else:
        tile = -(-n // 2)                      # aim for 2 grid steps
        tile = max(8, -(-tile // 8) * 8)       # round up to multiple of 8
        tile = min(tile, max_tile)
    n_pad = -(-n // tile) * tile
    return tile, n_pad


# ----------------------------------------------------------------------------
# Full forward pass (JAX glue around the fused kernel)
# ----------------------------------------------------------------------------
def baseline_model_forward(mix_audio, params, *, kernel_size=16, stride=8):
    """mix_audio: [B, T] float32.  Returns dict with s1/s2 of shape [B, T_out]."""
    assert kernel_size == 2 * stride, "framing glue assumes kernel == 2*stride"
    b, t = mix_audio.shape
    l = (t - kernel_size) // stride + 1          # encoder output length
    k = kernel_size

    # --- frame extraction (Conv1d with in_channels=1 becomes frames @ Wenc) ---
    xr = mix_audio[:, : (l + 1) * stride].reshape(b, l + 1, stride)
    frames = jnp.concatenate([xr[:, :l, :], xr[:, 1:l + 1, :]], axis=-1)  # [B, L, K]
    frames = frames.reshape(b * l, k)

    n = b * l
    tile_n, n_pad = _choose_tiling(n)
    if n_pad > n:                                 # pad rows; tail is dropped after
        frames = jnp.pad(frames, ((0, n_pad - n), (0, 0)))
    frames = frames.astype(jnp.bfloat16)

    # bf16 MXU operands (f32 accumulation inside the kernel); biases stay f32.
    wenc = params["wenc"].astype(jnp.bfloat16)
    w12 = jnp.concatenate([params["w1"], params["w2"]], axis=1).astype(jnp.bfloat16)
    b12 = jnp.concatenate([params["b1"], params["b2"]], axis=1)
    wdec1 = params["wdec1"].astype(jnp.bfloat16)
    wdec2 = params["wdec2"].astype(jnp.bfloat16)

    c = _fused_pallas(frames, wenc, params["benc"], w12, b12, wdec1, wdec2,
                      tile_n=tile_n)             # [n_pad, 2K] f32
    c = c[:n]
    c1 = c[:, :k].reshape(b, l, k)
    c2 = c[:, k:].reshape(b, l, k)

    # --- ConvTranspose1d overlap-add (stride=8, kernel=16 -> <=2 overlaps) ---
    def overlap_add(ct, bias):
        out = jnp.zeros((b, l + 1, stride), jnp.float32)
        out = out.at[:, :l, :].add(ct[:, :, :stride])
        out = out.at[:, 1:, :].add(ct[:, :, stride:])
        return out.reshape(b, (l + 1) * stride) + bias

    t_out = (l - 1) * stride + kernel_size
    s1 = overlap_add(c1, params["bdec1"])[:, :t_out]
    s2 = overlap_add(c2, params["bdec2"])[:, :t_out]
    return {"s1_predicted": s1, "s2_predicted": s2}


# ----------------------------------------------------------------------------
# Deterministic parameter init (matches shapes of the PyTorch module)
# ----------------------------------------------------------------------------
def init_params(key, hidden_size=128, kernel_size=16):
    ks = jax.random.split(key, 10)
    u = lambda kk, shp, bound: jax.random.uniform(kk, shp, jnp.float32, -bound, bound)
    h, kz = hidden_size, kernel_size
    return {
        # Encoder Conv1d(1, H, K): torch weight [H,1,K] -> stored [K, H]
        "wenc": u(ks[0], (kz, h), 1.0 / (1 * kz) ** 0.5),
        "benc": u(ks[1], (1, h), 1.0 / (1 * kz) ** 0.5),
        # Masking 1x1 convs Conv1d(H, H, 1): torch weight [H,H,1] -> stored [H_in, H_out]
        "w1": u(ks[2], (h, h), 1.0 / h ** 0.5),
        "b1": u(ks[3], (1, h), 1.0 / h ** 0.5),
        "w2": u(ks[4], (h, h), 1.0 / h ** 0.5),
        "b2": u(ks[5], (1, h), 1.0 / h ** 0.5),
        # Decoders ConvTranspose1d(H, 1, K): torch weight [H,1,K] -> stored [H, K]
        "wdec1": u(ks[6], (h, kz), 1.0 / (h * kz) ** 0.5),
        "bdec1": u(ks[7], (), 1.0 / (h * kz) ** 0.5),
        "wdec2": u(ks[8], (h, kz), 1.0 / (h * kz) ** 0.5),
        "bdec2": u(ks[9], (), 1.0 / (h * kz) ** 0.5),
    }


# Pure-JAX reference (same math, f32, no Pallas) for a sanity check.
def _reference_forward(x, p, kernel_size=16, stride=8):
    b, t = x.shape
    l = (t - kernel_size) // stride + 1
    frames = jnp.stack([jax.lax.dynamic_slice(x, (0, i * stride), (b, kernel_size))
                        for i in range(l)], axis=1)                  # [B, L, K]
    enc = jnp.maximum(frames @ p["wenc"] + p["benc"][0], 0.0)        # [B, L, H]
    m1 = jax.nn.sigmoid(enc @ p["w1"] + p["b1"][0])
    m2 = jax.nn.sigmoid(enc @ p["w2"] + p["b2"][0])
    c1 = (enc * m1) @ p["wdec1"]
    c2 = (enc * m2) @ p["wdec2"]
    t_out = (l - 1) * stride + kernel_size

    def ola(c, bias):
        out = jnp.zeros((b, t_out), jnp.float32)
        for i in range(l):
            out = jax.lax.dynamic_update_slice(
                out,
                jax.lax.dynamic_slice(out, (0, i * stride), (b, kernel_size)) + c[:, i, :],
                (0, i * stride))
        return out + bias

    return ola(c1, p["bdec1"]), ola(c2, p["bdec2"])


if __name__ == "__main__":
    B, T = 2, 152          # -> L = 18 frames, N = 36 (padded to 48, grid of 2 tiles)
    HIDDEN, KSZ, STRIDE = 128, 16, 8

    key = jax.random.PRNGKey(0)
    k_x, k_p = jax.random.split(key)
    x = jax.random.normal(k_x, (B, T), jnp.float32)
    params = init_params(k_p, HIDDEN, KSZ)

    fwd = jax.jit(functools.partial(baseline_model_forward,
                                    kernel_size=KSZ, stride=STRIDE))
    out = fwd(x, params)
    jax.block_until_ready(out)

    r1, r2 = _reference_forward(x, params, KSZ, STRIDE)
    L = (T - KSZ) // STRIDE + 1
    T_OUT = (L - 1) * STRIDE + KSZ
    assert out["s1_predicted"].shape == (B, T_OUT)
    assert out["s2_predicted"].shape == (B, T_OUT)
    # bf16 MXU operands (f32 accumulation) -> relaxed tolerance vs f32 reference.
    assert jnp.allclose(out["s1_predicted"], r1, atol=1e-2, rtol=1e-2)
    assert jnp.allclose(out["s2_predicted"], r2, atol=1e-2, rtol=1e-2)

    print("KERNEL_OK")
</pallas_src>

<mosaic_0001>
module attributes {stable_mosaic.version = 11 : i64} {
  func.func @_fused_kernel(%arg0: i32, %arg1: memref<24x16xbf16, #tpu.memory_space<vmem>>, %arg2: memref<16x128xbf16, #tpu.memory_space<vmem>>, %arg3: memref<1x128xf32, #tpu.memory_space<vmem>>, %arg4: memref<128x256xbf16, #tpu.memory_space<vmem>>, %arg5: memref<1x256xf32, #tpu.memory_space<vmem>>, %arg6: memref<128x16xbf16, #tpu.memory_space<vmem>>, %arg7: memref<128x16xbf16, #tpu.memory_space<vmem>>, %arg8: memref<24x32xf32, #tpu.memory_space<vmem>>) attributes {dimension_semantics = [#tpu.dimension_semantics<parallel>], iteration_bounds = array<i64: 2>, scalar_prefetch = 0 : i64, scratch_operands = 0 : i64, tpu.core_type = #tpu.core_type<tc>, window_params = [{transform_indices = @transform_0, window_bounds = array<i64: 24, 16>}, {pipeline_mode = #tpu.pipeline_mode<synchronous>, transform_indices = @transform_1, window_bounds = array<i64: 16, 128>}, {pipeline_mode = #tpu.pipeline_mode<synchronous>, transform_indices = @transform_2, window_bounds = array<i64: 1, 128>}, {pipeline_mode = #tpu.pipeline_mode<synchronous>, transform_indices = @transform_3, window_bounds = array<i64: 128, 256>}, {pipeline_mode = #tpu.pipeline_mode<synchronous>, transform_indices = @transform_4, window_bounds = array<i64: 1, 256>}, {pipeline_mode = #tpu.pipeline_mode<synchronous>, transform_indices = @transform_5, window_bounds = array<i64: 128, 16>}, {pipeline_mode = #tpu.pipeline_mode<synchronous>, transform_indices = @transform_6, window_bounds = array<i64: 128, 16>}, {transform_indices = @transform_7, window_bounds = array<i64: 24, 32>}]} {
    %c0 = arith.constant 0 : index
    %c0_0 = arith.constant 0 : index
    %0 = vector.load %arg1[%c0, %c0_0] : memref<24x16xbf16, #tpu.memory_space<vmem>>, vector<24x16xbf16>
    %c0_1 = arith.constant 0 : index
    %c0_2 = arith.constant 0 : index
    %1 = vector.load %arg2[%c0_1, %c0_2] : memref<16x128xbf16, #tpu.memory_space<vmem>>, vector<16x128xbf16>
    %cst = arith.constant dense<0.000000e+00> : vector<24x128xf32>
    %2 = tpu.matmul %0, %1, %cst {dimension_numbers = #tpu.dot_dimension_numbers<[1], [0], [0], [1], [0, 0, 1, 1], [], []>} : vector<24x16xbf16>, vector<16x128xbf16>, vector<24x128xf32> -> vector<24x128xf32>
    %c0_3 = arith.constant 0 : index
    %c0_4 = arith.constant 0 : index
    %3 = vector.load %arg3[%c0_3, %c0_4] : memref<1x128xf32, #tpu.memory_space<vmem>>, vector<1x128xf32>
    %4 = vector.broadcast %3 : vector<1x128xf32> to vector<24x128xf32>
    %5 = arith.addf %2, %4 : vector<24x128xf32>
    %cst_5 = arith.constant 0.000000e+00 : f32
    %6 = vector.broadcast %cst_5 : f32 to vector<24x128xf32>
    %7 = arith.maximumf %5, %6 : vector<24x128xf32>
    %8 = arith.truncf %7 : vector<24x128xf32> to vector<24x128xbf16>
    %c0_6 = arith.constant 0 : index
    %c0_7 = arith.constant 0 : index
    %9 = vector.load %arg4[%c0_6, %c0_7] : memref<128x256xbf16, #tpu.memory_space<vmem>>, vector<128x256xbf16>
    %cst_8 = arith.constant dense<0.000000e+00> : vector<24x256xf32>
    %10 = tpu.matmul %8, %9, %cst_8 {dimension_numbers = #tpu.dot_dimension_numbers<[1], [0], [0], [1], [0, 0, 1, 1], [], []>} : vector<24x128xbf16>, vector<128x256xbf16>, vector<24x256xf32> -> vector<24x256xf32>
    %c0_9 = arith.constant 0 : index
    %c0_10 = arith.constant 0 : index
    %11 = vector.load %arg5[%c0_9, %c0_10] : memref<1x256xf32, #tpu.memory_space<vmem>>, vector<1x256xf32>
    %12 = vector.broadcast %11 : vector<1x256xf32> to vector<24x256xf32>
    %13 = arith.addf %10, %12 : vector<24x256xf32>
    %cst_11 = arith.constant 5.000000e-01 : f32
    %14 = vector.broadcast %cst_11 : f32 to vector<24x256xf32>
    %15 = arith.mulf %14, %13 : vector<24x256xf32>
    %16 = math.tanh %15 : vector<24x256xf32>
    %cst_12 = arith.constant 5.000000e-01 : f32
    %17 = vector.broadcast %cst_12 : f32 to vector<24x256xf32>
    %18 = arith.mulf %17, %16 : vector<24x256xf32>
    %cst_13 = arith.constant 5.000000e-01 : f32
    %19 = vector.broadcast %cst_13 : f32 to vector<24x256xf32>
    %20 = arith.addf %18, %19 : vector<24x256xf32>
    %21 = vector.extract_strided_slice %20 {offsets = [0, 0], sizes = [24, 128], strides = [1, 1]} : vector<24x256xf32> to vector<24x128xf32>
    %22 = arith.mulf %7, %21 : vector<24x128xf32>
    %23 = arith.truncf %22 : vector<24x128xf32> to vector<24x128xbf16>
    %24 = vector.extract_strided_slice %20 {offsets = [0, 128], sizes = [24, 128], strides = [1, 1]} : vector<24x256xf32> to vector<24x128xf32>
    %25 = arith.mulf %7, %24 : vector<24x128xf32>
    %26 = arith.truncf %25 : vector<24x128xf32> to vector<24x128xbf16>
    %c0_14 = arith.constant 0 : index
    %c0_15 = arith.constant 0 : index
    %27 = vector.load %arg6[%c0_14, %c0_15] : memref<128x16xbf16, #tpu.memory_space<vmem>>, vector<128x16xbf16>
    %cst_16 = arith.constant dense<0.000000e+00> : vector<24x16xf32>
    %28 = tpu.matmul %23, %27, %cst_16 {dimension_numbers = #tpu.dot_dimension_numbers<[1], [0], [0], [1], [0, 0, 1, 1], [], []>} : vector<24x128xbf16>, vector<128x16xbf16>, vector<24x16xf32> -> vector<24x16xf32>
    %c0_17 = arith.constant 0 : index
    %c0_18 = arith.constant 0 : index
    %29 = vector.load %arg8[%c0_17, %c0_18] : memref<24x32xf32, #tpu.memory_space<vmem>>, vector<24x16xf32>
    tpu.vector_store %arg8[%c0_17, %c0_18], %28 {strides = array<i32>} : memref<24x32xf32, #tpu.memory_space<vmem>>, vector<24x16xf32>,
    %c0_19 = arith.constant 0 : index
    %c0_20 = arith.constant 0 : index
    %30 = vector.load %arg7[%c0_19, %c0_20] : memref<128x16xbf16, #tpu.memory_space<vmem>>, vector<128x16xbf16>
    %cst_21 = arith.constant dense<0.000000e+00> : vector<24x16xf32>
    %31 = tpu.matmul %26, %30, %cst_21 {dimension_numbers = #tpu.dot_dimension_numbers<[1], [0], [0], [1], [0, 0, 1, 1], [], []>} : vector<24x128xbf16>, vector<128x16xbf16>, vector<24x16xf32> -> vector<24x16xf32>
    %c0_22 = arith.constant 0 : index
    %c16 = arith.constant 16 : index
    %32 = vector.load %arg8[%c0_22, %c16] : memref<24x32xf32, #tpu.memory_space<vmem>>, vector<24x16xf32>
    tpu.vector_store %arg8[%c0_22, %c16], %31 {strides = array<i32>} : memref<24x32xf32, #tpu.memory_space<vmem>>, vector<24x16xf32>,
    return
  }
  func.func @transform_0(%arg0: i32) -> (i32, i32) {
    %c0_i32 = arith.constant 0 : i32
    %c0_i32_0 = arith.constant 0 : i32
    return %arg0, %c0_i32 : i32, i32
  }
  func.func @transform_1(%arg0: i32) -> (i32, i32) {
    %c0_i32 = arith.constant 0 : i32
    %c0_i32_0 = arith.constant 0 : i32
    %c0_i32_1 = arith.constant 0 : i32
    return %c0_i32, %c0_i32_0 : i32, i32
  }
  func.func @transform_2(%arg0: i32) -> (i32, i32) {
    %c0_i32 = arith.constant 0 : i32
    %c0_i32_0 = arith.constant 0 : i32
    %c0_i32_1 = arith.constant 0 : i32
    return %c0_i32, %c0_i32_0 : i32, i32
  }
  func.func @transform_3(%arg0: i32) -> (i32, i32) {
    %c0_i32 = arith.constant 0 : i32
    %c0_i32_0 = arith.constant 0 : i32
    %c0_i32_1 = arith.constant 0 : i32
    return %c0_i32, %c0_i32_0 : i32, i32
  }
  func.func @transform_4(%arg0: i32) -> (i32, i32) {
    %c0_i32 = arith.constant 0 : i32
    %c0_i32_0 = arith.constant 0 : i32
    %c0_i32_1 = arith.constant 0 : i32
    return %c0_i32, %c0_i32_0 : i32, i32
  }
  func.func @transform_5(%arg0: i32) -> (i32, i32) {
    %c0_i32 = arith.constant 0 : i32
    %c0_i32_0 = arith.constant 0 : i32
    %c0_i32_1 = arith.constant 0 : i32
    return %c0_i32, %c0_i32_0 : i32, i32
  }
  func.func @transform_6(%arg0: i32) -> (i32, i32) {
    %c0_i32 = arith.constant 0 : i32
    %c0_i32_0 = arith.constant 0 : i32
    %c0_i32_1 = arith.constant 0 : i32
    return %c0_i32, %c0_i32_0 : i32, i32
  }
  func.func @transform_7(%arg0: i32) -> (i32, i32) {
    %c0_i32 = arith.constant 0 : i32
    %c0_i32_0 = arith.constant 0 : i32
    return %arg0, %c0_i32 : i32, i32
  }
}

</mosaic_0001>

<llo_original>
// kernel: baseline_model_forward.1
$region0: #{baseline_model_forward.1}
  #allocation0 [shape = 'u32[]', space=smem, size = 0x4, offset = 0x4, fixed_abs, tag = 'smem constant byte address 0x4 - core index']
  #allocation1 [shape = 'u32[72,128]{1,0:T(1,128)}', space=vmem, size = 0x9000, scoped, tag = 'internal scratch']
  %s0 = inlined_call_operand.vmem [shape: bf16[48,16], index: 0, kind: input, shape index: {}]
  %s1 = inlined_call_operand.vmem [shape: bf16[16,128], index: 1, kind: input, shape index: {}]
  %s2 = inlined_call_operand.vmem [shape: f32[1,128], index: 2, kind: input, shape index: {}]
  %s3 = inlined_call_operand.vmem [shape: bf16[128,256], index: 3, kind: input, shape index: {}]
  %s4 = inlined_call_operand.vmem [shape: f32[1,256], index: 4, kind: input, shape index: {}]
  %s5 = inlined_call_operand.vmem [shape: bf16[128,16], index: 5, kind: input, shape index: {}]
  %s6 = inlined_call_operand.vmem [shape: bf16[128,16], index: 6, kind: input, shape index: {}]
  %s7 = inlined_call_operand.vmem [shape: f32[48,32], index: 7, kind: output, shape index: {}]
  %s8 = sld [smem:[#allocation0]]
  $region61: #{baseline_model_forward.1} parent=0
    _
  %s10 = ssub.s32 1, %s8
  %s11 = scalar_select 0, %s10, %s8
  loop: start=0, step=1, limit=4
  $region2: #{baseline_model_forward.1} parent=0 // loop_pre_header
    _
  $region3: #{baseline_model_forward.1} parent=0 // loop_header
    %s13 = sphi 0, %s17
    %p14 = scmp.ge.s32.totalorder %s13, 4
    %s23 = sphi 0, %s25
    %s26 = sphi 0, %s23
    %s27 = sphi 0, %s26
    %s43 = sphi 0, %s27
    %s47 = sphi 0, %s47
    %s49 = sphi 0, %s47
    %s50 = sphi 0, %s49
    %s64 = sphi 0, %s50
    %s68 = sphi 0, %s68
    %s70 = sphi 0, %s68
    %s71 = sphi 0, %s70
    %s85 = sphi 0, %s71
    %s89 = sphi 0, %s89
    %s91 = sphi 0, %s89
    %s92 = sphi 0, %s91
    %s106 = sphi 0, %s92
    %s110 = sphi 0, %s110
    %s112 = sphi 0, %s110
    %s113 = sphi 0, %s112
    %s127 = sphi 0, %s113
    %s131 = sphi 0, %s131
    %s133 = sphi 0, %s131
    %s134 = sphi 0, %s133
    %s148 = sphi 0, %s134
    %s152 = sphi 0, %s152
    %s154 = sphi 0, %s152
    %s155 = sphi 0, %s154
    %s169 = sphi 0, %s155
    %s175 = sphi 0, %s177
    %s178 = sphi 0, %s175
    %s179 = sphi 0, %s178
    %s195 = sphi 0, %s179
  $region4: #{baseline_model_forward.1} parent=0 // loop_header_branch
    %16 = sbr.rel (%p14) target = $region8
  $region5: #{baseline_model_forward.1} parent=0 // loop_body
    %s18 = ssub.s32 %s13, 1
    %s19 = ssub.s32 %s13, 2
    %s20 = sadd.s32 %s13, 1
    %s21 = ssub.s32 %s13, %s20
    %p22 = scmp.eq.s32.totalorder %s21, 0
    %s24 = sadd.s32 %s23, 1
    %s25 = scalar_select %p22, %s23, %s24
    %p28 = pneg %p22
    %p29 = scmp.eq.s32.totalorder %s13, 1
    %p30 = por %p28, %p29
    %p31 = scmp.ne.s32.totalorder %s23, %s26
    %p32 = scmp.eq.s32.totalorder %s13, 0
    %p33 = por %p31, %p32
    %p34 = scmp.ne.s32.totalorder %s23, %s26
    %p35 = scmp.eq.s32.totalorder %s18, 1
    %p36 = por %p34, %p35
    %p37 = scmp.ne.s32.totalorder %s26, %s27
    %p38 = scmp.eq.s32.totalorder %s18, 0
    %p39 = por %p37, %p38
    %p40 = scmp.ne.s32.totalorder %s26, %s27
    %p41 = scmp.eq.s32.totalorder %s19, 1
    %p42 = por %p40, %p41
    %p44 = scmp.ne.s32.totalorder %s27, %s43
    %p45 = scmp.eq.s32.totalorder %s19, 0
    %p46 = por %p44, %p45
    %s48 = sadd.s32 %s47, 1
    %p51 = scmp.eq.s32.totalorder %s13, 1
    %p52 = scmp.ne.s32.totalorder %s47, %s49
    %p53 = scmp.eq.s32.totalorder %s13, 0
    %p54 = por %p52, %p53
    %p55 = scmp.ne.s32.totalorder %s47, %s49
    %p56 = scmp.eq.s32.totalorder %s18, 1
    %p57 = por %p55, %p56
    %p58 = scmp.ne.s32.totalorder %s49, %s50
    %p59 = scmp.eq.s32.totalorder %s18, 0
    %p60 = por %p58, %p59
    %p61 = scmp.ne.s32.totalorder %s49, %s50
    %p62 = scmp.eq.s32.totalorder %s19, 1
    %p63 = por %p61, %p62
    %p65 = scmp.ne.s32.totalorder %s50, %s64
    %p66 = scmp.eq.s32.totalorder %s19, 0
    %p67 = por %p65, %p66
    %s69 = sadd.s32 %s68, 1
    %p72 = scmp.eq.s32.totalorder %s13, 1
    %p73 = scmp.ne.s32.totalorder %s68, %s70
    %p74 = scmp.eq.s32.totalorder %s13, 0
    %p75 = por %p73, %p74
    %p76 = scmp.ne.s32.totalorder %s68, %s70
    %p77 = scmp.eq.s32.totalorder %s18, 1
    %p78 = por %p76, %p77
    %p79 = scmp.ne.s32.totalorder %s70, %s71
    %p80 = scmp.eq.s32.totalorder %s18, 0
    %p81 = por %p79, %p80
    %p82 = scmp.ne.s32.totalorder %s70, %s71
    %p83 = scmp.eq.s32.totalorder %s19, 1
    %p84 = por %p82, %p83
    %p86 = scmp.ne.s32.totalorder %s71, %s85
    %p87 = scmp.eq.s32.totalorder %s19, 0
    %p88 = por %p86, %p87
    %s90 = sadd.s32 %s89, 1
    %p93 = scmp.eq.s32.totalorder %s13, 1
    %p94 = scmp.ne.s32.totalorder %s89, %s91
    %p95 = scmp.eq.s32.totalorder %s13, 0
    %p96 = por %p94, %p95
    %p97 = scmp.ne.s32.totalorder %s89, %s91
    %p98 = scmp.eq.s32.totalorder %s18, 1
    %p99 = por %p97, %p98
    %p100 = scmp.ne.s32.totalorder %s91, %s92
    %p101 = scmp.eq.s32.totalorder %s18, 0
    %p102 = por %p100, %p101
    %p103 = scmp.ne.s32.totalorder %s91, %s92
    %p104 = scmp.eq.s32.totalorder %s19, 1
    %p105 = por %p103, %p104
    %p107 = scmp.ne.s32.totalorder %s92, %s106
    %p108 = scmp.eq.s32.totalorder %s19, 0
    %p109 = por %p107, %p108
    %s111 = sadd.s32 %s110, 1
    %p114 = scmp.eq.s32.totalorder %s13, 1
    %p115 = scmp.ne.s32.totalorder %s110, %s112
    %p116 = scmp.eq.s32.totalorder %s13, 0
    %p117 = por %p115, %p116
    %p118 = scmp.ne.s32.totalorder %s110, %s112
    %p119 = scmp.eq.s32.totalorder %s18, 1
    %p120 = por %p118, %p119
    %p121 = scmp.ne.s32.totalorder %s112, %s113
    %p122 = scmp.eq.s32.totalorder %s18, 0
    %p123 = por %p121, %p122
    %p124 = scmp.ne.s32.totalorder %s112, %s113
    %p125 = scmp.eq.s32.totalorder %s19, 1
    %p126 = por %p124, %p125
    %p128 = scmp.ne.s32.totalorder %s113, %s127
    %p129 = scmp.eq.s32.totalorder %s19, 0
    %p130 = por %p128, %p129
    %s132 = sadd.s32 %s131, 1
    %p135 = scmp.eq.s32.totalorder %s13, 1
    %p136 = scmp.ne.s32.totalorder %s131, %s133
    %p137 = scmp.eq.s32.totalorder %s13, 0
    %p138 = por %p136, %p137
    %p139 = scmp.ne.s32.totalorder %s131, %s133
    %p140 = scmp.eq.s32.totalorder %s18, 1
    %p141 = por %p139, %p140
    %p142 = scmp.ne.s32.totalorder %s133, %s134
    %p143 = scmp.eq.s32.totalorder %s18, 0
    %p144 = por %p142, %p143
    %p145 = scmp.ne.s32.totalorder %s133, %s134
    %p146 = scmp.eq.s32.totalorder %s19, 1
    %p147 = por %p145, %p146
    %p149 = scmp.ne.s32.totalorder %s134, %s148
    %p150 = scmp.eq.s32.totalorder %s19, 0
    %p151 = por %p149, %p150
    %s153 = sadd.s32 %s152, 1
    %p156 = scmp.eq.s32.totalorder %s13, 1
    %p157 = scmp.ne.s32.totalorder %s152, %s154
    %p158 = scmp.eq.s32.totalorder %s13, 0
    %p159 = por %p157, %p158
    %p160 = scmp.ne.s32.totalorder %s152, %s154
    %p161 = scmp.eq.s32.totalorder %s18, 1
    %p162 = por %p160, %p161
    %p163 = scmp.ne.s32.totalorder %s154, %s155
    %p164 = scmp.eq.s32.totalorder %s18, 0
    %p165 = por %p163, %p164
    %p166 = scmp.ne.s32.totalorder %s154, %s155
    %p167 = scmp.eq.s32.totalorder %s19, 1
    %p168 = por %p166, %p167
    %p170 = scmp.ne.s32.totalorder %s155, %s169
    %p171 = scmp.eq.s32.totalorder %s19, 0
    %p172 = por %p170, %p171
    %s173 = ssub.s32 %s13, %s20
    %p174 = scmp.eq.s32.totalorder %s173, 0
    %s176 = sadd.s32 %s175, 1
    %s177 = scalar_select %p174, %s175, %s176
    %p180 = pneg %p174
    %p181 = scmp.eq.s32.totalorder %s13, 1
    %p182 = por %p180, %p181
    %p183 = scmp.ne.s32.totalorder %s175, %s178
    %p184 = scmp.eq.s32.totalorder %s13, 0
    %p185 = por %p183, %p184
    %p186 = scmp.ne.s32.totalorder %s175, %s178
    %p187 = scmp.eq.s32.totalorder %s18, 1
    %p188 = por %p186, %p187
    %p189 = scmp.ne.s32.totalorder %s178, %s179
    %p190 = scmp.eq.s32.totalorder %s18, 0
    %p191 = por %p189, %p190
    %p192 = scmp.ne.s32.totalorder %s178, %s179
    %p193 = scmp.eq.s32.totalorder %s19, 1
    %p194 = por %p192, %p193
    %p196 = scmp.ne.s32.totalorder %s179, %s195
    %p197 = scmp.eq.s32.totalorder %s19, 0
    %p198 = por %p196, %p197
    %p199 = scmp.le.s32.totalorder 1, %s13
    %p200 = scmp.lt.s32.totalorder %s13, 3
    %p201 = pnand %p199, %p200
    %p202 = pneg %p201
    // Predicated region
    $region9: #{baseline_model_forward.1} parent=5 // pred_check
      _
    $region10: #{baseline_model_forward.1} parent=5 // pred_check_branch
      %204 = sbr.rel (%p201) target = $region12
    $region11: #{baseline_model_forward.1} parent=5 // pred_region
      %s205 = ssub.s32 %s13, 1
      // Predicated region
      $region13: #{baseline_model_forward.1} parent=11 // pred_check
        %p206 = pneg %p60
      $region14: #{baseline_model_forward.1} parent=11 // pred_check_branch
        %208 = sbr.rel (%p206) target = $region16
      $region15: #{baseline_model_forward.1} parent=11 // pred_region
        _
      $region16: #{baseline_model_forward.1} parent=11 // pred_fallthru
        _
      // Predicated region
      $region17: #{baseline_model_forward.1} parent=11 // pred_check
        %p209 = pneg %p81
      $region18: #{baseline_model_forward.1} parent=11 // pred_check_branch
        %211 = sbr.rel (%p209) target = $region20
      $region19: #{baseline_model_forward.1} parent=11 // pred_region
        _
      $region20: #{baseline_model_forward.1} parent=11 // pred_fallthru
        _
      // Predicated region
      $region21: #{baseline_model_forward.1} parent=11 // pred_check
        %p212 = pneg %p102
      $region22: #{baseline_model_forward.1} parent=11 // pred_check_branch
        %214 = sbr.rel (%p212) target = $region24
      $region23: #{baseline_model_forward.1} parent=11 // pred_region
        _
      $region24: #{baseline_model_forward.1} parent=11 // pred_fallthru
        _
      // Predicated region
      $region25: #{baseline_model_forward.1} parent=11 // pred_check
        %p215 = pneg %p123
      $region26: #{baseline_model_forward.1} parent=11 // pred_check_branch
        %217 = sbr.rel (%p215) target = $region28
      $region27: #{baseline_model_forward.1} parent=11 // pred_region
        _
      $region28: #{baseline_model_forward.1} parent=11 // pred_fallthru
        _
      // Predicated region
      $region29: #{baseline_model_forward.1} parent=11 // pred_check
        %p218 = pneg %p144
      $region30: #{baseline_model_forward.1} parent=11 // pred_check_branch
        %220 = sbr.rel (%p218) target = $region32
      $region31: #{baseline_model_forward.1} parent=11 // pred_region
        _
      $region32: #{baseline_model_forward.1} parent=11 // pred_fallthru
        _
      // Predicated region
      $region33: #{baseline_model_forward.1} parent=11 // pred_check
        %p221 = pneg %p165
      $region34: #{baseline_model_forward.1} parent=11 // pred_check_branch
        %223 = sbr.rel (%p221) target = $region36
      $region35: #{baseline_model_forward.1} parent=11 // pred_region
        _
      $region36: #{baseline_model_forward.1} parent=11 // pred_fallthru
        _
    $region12: #{baseline_model_forward.1} parent=5 // pred_fallthru
      _
    %p224 = scmp.lt.s32.totalorder %s13, 2
    // Predicated region
    $region37: #{baseline_model_forward.1} parent=5 // pred_check
      %p225 = pneg %p224
    $region38: #{baseline_model_forward.1} parent=5 // pred_check_branch
      %227 = sbr.rel (%p225) target = $region40
    $region39: #{baseline_model_forward.1} parent=5 // pred_region
      // Predicated region
      $region41: #{baseline_model_forward.1} parent=39 // pred_check
        %p228 = pneg %p33
      $region42: #{baseline_model_forward.1} parent=39 // pred_check_branch
        %230 = sbr.rel (%p228) target = $region44
      $region43: #{baseline_model_forward.1} parent=39 // pred_region
        %s231 = smul.u32 3, %s13
        %p232 = scmp.lt.s32.totalorder %s231, 5
        %s233 = scalar_select %p232, %s231, 5
        %s234 = smul.addr %s233, 4
        %s235 = scalar_lea.vmem %s0, %s234
        %s236 = smul.u32 3, %s13
      $region44: #{baseline_model_forward.1} parent=39 // pred_fallthru
        _
    $region40: #{baseline_model_forward.1} parent=5 // pred_fallthru
      _
    %p237 = scmp.le.s32.totalorder 1, %s13
    %p238 = scmp.lt.s32.totalorder %s13, 3
    %p239 = pnand %p237, %p238
    %p240 = pneg %p239
    // Predicated region
    $region45: #{baseline_model_forward.1} parent=5 // pred_check
      _
    $region46: #{baseline_model_forward.1} parent=5 // pred_check_branch
      %242 = sbr.rel (%p239) target = $region48
    $region47: #{baseline_model_forward.1} parent=5 // pred_region
      %s243 = ssub.s32 %s13, 1
      %s244 = smul.u32 3, %s18
      %p245 = scmp.lt.s32.totalorder %s244, 5
      %s246 = scalar_select %p245, %s244, 5
      %s247 = smul.addr %s246, 4
      %s248 = scalar_lea.vmem %s0, %s247
      %p249 = pneg %p39
      %p250 = pneg %p36
      %p251 = pneg %p60
      %p252 = pneg %p57
      %p253 = pneg %p81
      %p254 = pneg %p78
      %p255 = pneg %p102
      %p256 = pneg %p99
      %p257 = pneg %p123
      %p258 = pneg %p120
      %p259 = pneg %p144
      %p260 = pneg %p141
      %p261 = pneg %p165
      %p262 = pneg %p162
      %p263 = pneg %p191
      %p264 = pneg %p188
      %s265 = smul.u32 3, %s18
      %p266 = scmp.lt.s32.totalorder %s265, 5
      %s267 = scalar_select %p266, %s265, 5
      %s268 = smul.addr %s267, 8
      %s269 = scalar_lea.vmem %s7, %s268
      %s270 = smul.u32 3, %s18
      %p271 = scmp.lt.s32.totalorder %s270, 5
      %s272 = scalar_select %p271, %s270, 5
      %s273 = smul.addr %s272, 4
      %s274 = scalar_lea.vmem %s0, %s273
      %s275 = smul.u32 3, %s18
      %s276 = smul.u32 3, %s18
      %p277 = scmp.lt.s32.totalorder %s276, 5
      %s278 = scalar_select %p277, %s276, 5
      %s279 = smul.addr %s278, 8
      %s280 = scalar_lea.vmem %s7, %s279
      %s281 = smul.u32 3, %s18
      %v283 = vld [vmem:[%s274] sm:$0xf]
      %v284 = vld [vmem:[%s274 + $0x4] sm:$0xf]
      %v285 = vld [vmem:[%s274 + $0x8] sm:$0xf]
      %v286 = vld [vmem:[%s1] sm:$0xf]
      %v287 = vld [vmem:[%s1 + $0x4] sm:$0xf]
      %v288 = vld [vmem:[%s2] sm:$0x1]
      %v290 = vperm.slane %v288, 0
      %v295 = vunpack.c.l.b16 %v283
      %v296 = vunpack.c.l.b16 %v284
      %v297 = vunpack.c.l.b16 %v285
      %v298 = vpack.c.b16 %v296, %v295
      %v299 = vpack.c.b16 %v297, %v297
      %v302 = vunpack.c.l.b16 %v286
      %v303 = vunpack.c.l.b16 %v287
      %v304 = vpack.c.b16 %v303, %v302
      %vm306 = vcmask 130048
      %v308 = vsel %vm306, %v298, 0
      %v311 = vsel %vm306, %v299, 0
      %313 = vmatpush.bf16.msra.mxu0 0
      %314 = vmatpush.bf16.msra.mxu0 0
      %315 = vmatpush.bf16.msra.mxu0 0
      %316 = vmatpush.bf16.msra.mxu0 0
      %317 = vmatpush.bf16.msra.mxu0 0
      %318 = vmatpush.bf16.msra.mxu0 0
      %319 = vmatpush.bf16.msra.mxu0 0
      %320 = vmatpush.bf16.msra.mxu0 %v304
      %321 = vmatmul.bf16.gmra.mxu0 %v308
      %v322 = vpop.f32.mrf.mxu0
      %v323 = vadd.f32 %v290, %v322
      %v324 = vpop.f32.mrf.mxu0
      %v325 = vadd.f32 %v290, %v324
      %326 = vmatmul.bf16.gmra.mxu0 %v311
      %v327 = vpop.f32.mrf.mxu0
      %v328 = vadd.f32 %v290, %v327
      %v329 = vpop.f32.mrf.mxu0
      %330 = vdwg.mxu0
      %v331 = vmax.f32 %v323, 0.0
      %v332 = vmax.f32 %v325, 0.0
      %v333 = vmax.f32 %v328, 0.0
      %v334 = vpack.c.bf16 %v332, %v331
      %v335 = vpack.c.bf16 %v333, %v333
      %v336 = vld [vmem:[%s3] sm:$0xff]
      %v337 = vld [vmem:[%s3 + $0x8] sm:$0xff]
      %v338 = vld [vmem:[%s3 + $0x10] sm:$0xff]
      %v339 = vld [vmem:[%s3 + $0x18] sm:$0xff]
      %v340 = vld [vmem:[%s3 + $0x20] sm:$0xff]
      %v341 = vld [vmem:[%s3 + $0x28] sm:$0xff]
      %v342 = vld [vmem:[%s3 + $0x30] sm:$0xff]
      %v343 = vld [vmem:[%s3 + $0x38] sm:$0xff]
      %v344 = vld [vmem:[%s3 + $0x40] sm:$0xff]
      %v345 = vld [vmem:[%s3 + $0x48] sm:$0xff]
      %v346 = vld [vmem:[%s3 + $0x50] sm:$0xff]
      %v347 = vld [vmem:[%s3 + $0x58] sm:$0xff]
      %v348 = vld [vmem:[%s3 + $0x60] sm:$0xff]
      %v349 = vld [vmem:[%s3 + $0x68] sm:$0xff]
      %v350 = vld [vmem:[%s3 + $0x70] sm:$0xff]
      %v351 = vld [vmem:[%s3 + $0x78] sm:$0xff]
      %v352 = vld [vmem:[%s4] sm:$0x3]
      %v354 = vperm.slane %v352, 0
      %v355 = vperm.slane %v352, 1
      %v374 = vunpack.c.l.b16 %v336
      %v375 = vunpack.c.h.b16 %v336
      %v376 = vunpack.c.l.b16 %v337
      %v377 = vunpack.c.h.b16 %v337
      %v378 = vunpack.c.l.b16 %v338
      %v379 = vunpack.c.h.b16 %v338
      %v380 = vunpack.c.l.b16 %v339
      %v381 = vunpack.c.h.b16 %v339
      %v382 = vunpack.c.l.b16 %v340
      %v383 = vunpack.c.h.b16 %v340
      %v384 = vunpack.c.l.b16 %v341
      %v385 = vunpack.c.h.b16 %v341
      %v386 = vunpack.c.l.b16 %v342
      %v387 = vunpack.c.h.b16 %v342
      %v388 = vunpack.c.l.b16 %v343
      %v389 = vunpack.c.h.b16 %v343
      %v390 = vunpack.c.l.b16 %v344
      %v391 = vunpack.c.h.b16 %v344
      %v392 = vunpack.c.l.b16 %v345
      %v393 = vunpack.c.h.b16 %v345
      %v394 = vunpack.c.l.b16 %v346
      %v395 = vunpack.c.h.b16 %v346
      %v396 = vunpack.c.l.b16 %v347
      %v397 = vunpack.c.h.b16 %v347
      %v398 = vunpack.c.l.b16 %v348
      %v399 = vunpack.c.h.b16 %v348
      %v400 = vunpack.c.l.b16 %v349
      %v401 = vunpack.c.h.b16 %v349
      %v402 = vunpack.c.l.b16 %v350
      %v403 = vunpack.c.h.b16 %v350
      %v404 = vunpack.c.l.b16 %v351
      %v405 = vunpack.c.h.b16 %v351
      %v406 = vpack.c.b16 %v376, %v374
      %v407 = vpack.c.b16 %v377, %v375
      %v408 = vpack.c.b16 %v380, %v378
      %v409 = vpack.c.b16 %v381, %v379
      %v410 = vpack.c.b16 %v384, %v382
      %v411 = vpack.c.b16 %v385, %v383
      %v412 = vpack.c.b16 %v388, %v386
      %v413 = vpack.c.b16 %v389, %v387
      %v414 = vpack.c.b16 %v392, %v390
      %v415 = vpack.c.b16 %v393, %v391
      %v416 = vpack.c.b16 %v396, %v394
      %v417 = vpack.c.b16 %v397, %v395
      %v418 = vpack.c.b16 %v400, %v398
      %v419 = vpack.c.b16 %v401, %v399
      %v420 = vpack.c.b16 %v404, %v402
      %v421 = vpack.c.b16 %v405, %v403
      %438 = vmatpush.bf16.msra.mxu0 %v420
      %439 = vmatpush.bf16.msra.mxu0 %v418
      %440 = vmatpush.bf16.msra.mxu0 %v416
      %441 = vmatpush.bf16.msra.mxu0 %v414
      %442 = vmatpush.bf16.msra.mxu0 %v412
      %443 = vmatpush.bf16.msra.mxu0 %v410
      %444 = vmatpush.bf16.msra.mxu0 %v408
      %445 = vmatpush.bf16.msra.mxu0 %v406
      %446 = vmatmul.bf16.gmra.mxu0 %v334
      %v447 = vpop.f32.mrf.mxu0
      %v448 = vadd.f32 %v354, %v447
      %v449 = vpop.f32.mrf.mxu0
      %v450 = vadd.f32 %v354, %v449
      %451 = vmatmul.bf16.gmra.mxu0 %v335
      %v452 = vpop.f32.mrf.mxu0
      %v453 = vadd.f32 %v354, %v452
      %v454 = vpop.f32.mrf.mxu0
      %455 = vdwg.mxu0
      %456 = vmatpush.bf16.msra.mxu0 %v421
      %457 = vmatpush.bf16.msra.mxu0 %v419
      %458 = vmatpush.bf16.msra.mxu0 %v417
      %459 = vmatpush.bf16.msra.mxu0 %v415
      %460 = vmatpush.bf16.msra.mxu0 %v413
      %461 = vmatpush.bf16.msra.mxu0 %v411
      %462 = vmatpush.bf16.msra.mxu0 %v409
      %463 = vmatpush.bf16.msra.mxu0 %v407
      %464 = vmatmul.bf16.gmra.mxu0 %v334
      %v465 = vpop.f32.mrf.mxu0
      %v466 = vadd.f32 %v355, %v465
      %v467 = vpop.f32.mrf.mxu0
      %v468 = vadd.f32 %v355, %v467
      %469 = vmatmul.bf16.gmra.mxu0 %v335
      %v470 = vpop.f32.mrf.mxu0
      %v471 = vadd.f32 %v355, %v470
      %v472 = vpop.f32.mrf.mxu0
      %473 = vdwg.mxu0
      %v474 = vmul.f32 %v448, 0.5
      %v475 = vmul.f32 %v466, 0.5
      %v476 = vmul.f32 %v450, 0.5
      %v477 = vmul.f32 %v468, 0.5
      %v478 = vmul.f32 %v453, 0.5
      %v479 = vmul.f32 %v471, 0.5
      %v480 = vtanh.pop %v474
      %v481 = vtanh.pop %v475
      %v482 = vtanh.pop %v476
      %v483 = vtanh.pop %v477
      %v484 = vtanh.pop %v478
      %v485 = vtanh.pop %v479
      %v486 = vmul.f32 %v480, 0.5
      %v487 = vmul.f32 %v481, 0.5
      %v488 = vmul.f32 %v482, 0.5
      %v489 = vmul.f32 %v483, 0.5
      %v490 = vmul.f32 %v484, 0.5
      %v491 = vmul.f32 %v485, 0.5
      %v492 = vadd.f32 %v486, 0.5
      %v493 = vadd.f32 %v487, 0.5
      %v494 = vadd.f32 %v488, 0.5
      %v495 = vadd.f32 %v489, 0.5
      %v496 = vadd.f32 %v490, 0.5
      %v497 = vadd.f32 %v491, 0.5
      %v498 = vmul.f32 %v331, %v492
      %v499 = vmul.f32 %v332, %v494
      %v500 = vmul.f32 %v333, %v496
      %v501 = vpack.c.bf16 %v499, %v498
      %v502 = vpack.c.bf16 %v500, %v500
      %v503 = vmul.f32 %v331, %v493
      %v504 = vmul.f32 %v332, %v495
      %v505 = vmul.f32 %v333, %v497
      %v506 = vpack.c.bf16 %v504, %v503
      %v507 = vpack.c.bf16 %v505, %v505
      %v508 = vld [vmem:[%s5] sm:$0xf]
      %v509 = vld [vmem:[%s5 + $0x4] sm:$0xf]
      %v510 = vld [vmem:[%s5 + $0x8] sm:$0xf]
      %v511 = vld [vmem:[%s5 + $0xc] sm:$0xf]
      %v512 = vld [vmem:[%s5 + $0x10] sm:$0xf]
      %v513 = vld [vmem:[%s5 + $0x14] sm:$0xf]
      %v514 = vld [vmem:[%s5 + $0x18] sm:$0xf]
      %v515 = vld [vmem:[%s5 + $0x1c] sm:$0xf]
      %v516 = vld [vmem:[%s5 + $0x20] sm:$0xf]
      %v517 = vld [vmem:[%s5 + $0x24] sm:$0xf]
      %v518 = vld [vmem:[%s5 + $0x28] sm:$0xf]
      %v519 = vld [vmem:[%s5 + $0x2c] sm:$0xf]
      %v520 = vld [vmem:[%s5 + $0x30] sm:$0xf]
      %v521 = vld [vmem:[%s5 + $0x34] sm:$0xf]
      %v522 = vld [vmem:[%s5 + $0x38] sm:$0xf]
      %v523 = vld [vmem:[%s5 + $0x3c] sm:$0xf]
      %v540 = vunpack.c.l.b16 %v508
      %v541 = vunpack.c.l.b16 %v509
      %v542 = vunpack.c.l.b16 %v510
      %v543 = vunpack.c.l.b16 %v511
      %v544 = vunpack.c.l.b16 %v512
      %v545 = vunpack.c.l.b16 %v513
      %v546 = vunpack.c.l.b16 %v514
      %v547 = vunpack.c.l.b16 %v515
      %v548 = vunpack.c.l.b16 %v516
      %v549 = vunpack.c.l.b16 %v517
      %v550 = vunpack.c.l.b16 %v518
      %v551 = vunpack.c.l.b16 %v519
      %v552 = vunpack.c.l.b16 %v520
      %v553 = vunpack.c.l.b16 %v521
      %v554 = vunpack.c.l.b16 %v522
      %v555 = vunpack.c.l.b16 %v523
      %v556 = vpack.c.b16 %v541, %v540
      %v557 = vpack.c.b16 %v543, %v542
      %v558 = vpack.c.b16 %v545, %v544
      %v559 = vpack.c.b16 %v547, %v546
      %v560 = vpack.c.b16 %v549, %v548
      %v561 = vpack.c.b16 %v551, %v550
      %v562 = vpack.c.b16 %v553, %v552
      %v563 = vpack.c.b16 %v555, %v554
      %572 = vmatpush.bf16.msra.mxu0 %v563
      %573 = vmatpush.bf16.msra.mxu0 %v562
      %574 = vmatpush.bf16.msra.mxu0 %v561
      %575 = vmatpush.bf16.msra.mxu0 %v560
      %576 = vmatpush.bf16.msra.mxu0 %v559
      %577 = vmatpush.bf16.msra.mxu0 %v558
      %578 = vmatpush.bf16.msra.mxu0 %v557
      %579 = vmatpush.bf16.msra.mxu0 %v556
      %580 = vmatmul.bf16.gmra.mxu0 %v501
      %v581 = vpop.f32.mrf.mxu0
      %v582 = vadd.f32 0.0, %v581
      %v583 = vpop.f32.mrf.mxu0
      %v584 = vadd.f32 0.0, %v583
      %585 = vmatmul.bf16.gmra.mxu0 %v502
      %v586 = vpop.f32.mrf.mxu0
      %v587 = vadd.f32 0.0, %v586
      %v588 = vpop.f32.mrf.mxu0
      %589 = vdwg.mxu0
      %590 = vst.msk [vmem:[%s280] sm:$0xff] %vm306, %v582
      %591 = vst.msk [vmem:[%s280 + $0x8] sm:$0xff] %vm306, %v584
      %592 = vst.msk [vmem:[%s280 + $0x10] sm:$0xff] %vm306, %v587
      %v593 = vld [vmem:[%s6] sm:$0xf]
      %v594 = vld [vmem:[%s6 + $0x4] sm:$0xf]
      %v595 = vld [vmem:[%s6 + $0x8] sm:$0xf]
      %v596 = vld [vmem:[%s6 + $0xc] sm:$0xf]
      %v597 = vld [vmem:[%s6 + $0x10] sm:$0xf]
      %v598 = vld [vmem:[%s6 + $0x14] sm:$0xf]
      %v599 = vld [vmem:[%s6 + $0x18] sm:$0xf]
      %v600 = vld [vmem:[%s6 + $0x1c] sm:$0xf]
      %v601 = vld [vmem:[%s6 + $0x20] sm:$0xf]
      %v602 = vld [vmem:[%s6 + $0x24] sm:$0xf]
      %v603 = vld [vmem:[%s6 + $0x28] sm:$0xf]
      %v604 = vld [vmem:[%s6 + $0x2c] sm:$0xf]
      %v605 = vld [vmem:[%s6 + $0x30] sm:$0xf]
      %v606 = vld [vmem:[%s6 + $0x34] sm:$0xf]
      %v607 = vld [vmem:[%s6 + $0x38] sm:$0xf]
      %v608 = vld [vmem:[%s6 + $0x3c] sm:$0xf]
      %v625 = vunpack.c.l.b16 %v593
      %v626 = vunpack.c.l.b16 %v594
      %v627 = vunpack.c.l.b16 %v595
      %v628 = vunpack.c.l.b16 %v596
      %v629 = vunpack.c.l.b16 %v597
      %v630 = vunpack.c.l.b16 %v598
      %v631 = vunpack.c.l.b16 %v599
      %v632 = vunpack.c.l.b16 %v600
      %v633 = vunpack.c.l.b16 %v601
      %v634 = vunpack.c.l.b16 %v602
      %v635 = vunpack.c.l.b16 %v603
      %v636 = vunpack.c.l.b16 %v604
      %v637 = vunpack.c.l.b16 %v605
      %v638 = vunpack.c.l.b16 %v606
      %v639 = vunpack.c.l.b16 %v607
      %v640 = vunpack.c.l.b16 %v608
      %v641 = vpack.c.b16 %v626, %v625
      %v642 = vpack.c.b16 %v628, %v627
      %v643 = vpack.c.b16 %v630, %v629
      %v644 = vpack.c.b16 %v632, %v631
      %v645 = vpack.c.b16 %v634, %v633
      %v646 = vpack.c.b16 %v636, %v635
      %v647 = vpack.c.b16 %v638, %v637
      %v648 = vpack.c.b16 %v640, %v639
      %657 = vmatpush.bf16.msra.mxu0 %v648
      %658 = vmatpush.bf16.msra.mxu0 %v647
      %659 = vmatpush.bf16.msra.mxu0 %v646
      %660 = vmatpush.bf16.msra.mxu0 %v645
      %661 = vmatpush.bf16.msra.mxu0 %v644
      %662 = vmatpush.bf16.msra.mxu0 %v643
      %663 = vmatpush.bf16.msra.mxu0 %v642
      %664 = vmatpush.bf16.msra.mxu0 %v641
      %665 = vmatmul.bf16.gmra.mxu0 %v506
      %v666 = vpop.f32.mrf.mxu0
      %v667 = vadd.f32 0.0, %v666
      %v668 = vpop.f32.mrf.mxu0
      %v669 = vadd.f32 0.0, %v668
      %670 = vmatmul.bf16.gmra.mxu0 %v507
      %v671 = vpop.f32.mrf.mxu0
      %v672 = vadd.f32 0.0, %v671
      %v673 = vpop.f32.mrf.mxu0
      %674 = vdwg.mxu0
      %678 = vrot.lane.b32.xlu0 %v667, 16
      %v679 = vpop.permute.xlu0 %678
      %680 = vrot.lane.b32.xlu0 %v669, 16
      %v681 = vpop.permute.xlu0 %680
      %682 = vrot.lane.b32.xlu0 %v672, 16
      %v683 = vpop.permute.xlu0 %682
      %vm687 = vcmask 261248
      %688 = vst.msk [vmem:[%s280] sm:$0xff] %vm687, %v679
      %689 = vst.msk [vmem:[%s280 + $0x8] sm:$0xff] %vm687, %v681
      %690 = vst.msk [vmem:[%s280 + $0x10] sm:$0xff] %vm687, %v683
      %s691 = smul.u32 3, %s18
      %p692 = scmp.lt.s32.totalorder %s691, 5
      %s693 = scalar_select %p692, %s691, 5
      %s694 = smul.addr %s693, 8
      %s695 = scalar_lea.vmem %s7, %s694
      // Predicated region
      $region49: #{baseline_model_forward.1} parent=47 // pred_check
        %p696 = pneg %p188
      $region50: #{baseline_model_forward.1} parent=47 // pred_check_branch
        %698 = sbr.rel (%p696) target = $region52
      $region51: #{baseline_model_forward.1} parent=47 // pred_region
        %s699 = smul.u32 3, %s18
      $region52: #{baseline_model_forward.1} parent=47 // pred_fallthru
        _
    $region48: #{baseline_model_forward.1} parent=5 // pred_fallthru
      _
    %p700 = scmp.le.s32.totalorder 2, %s13
    // Predicated region
    $region53: #{baseline_model_forward.1} parent=5 // pred_check
      %p701 = pneg %p700
    $region54: #{baseline_model_forward.1} parent=5 // pred_check_branch
      %703 = sbr.rel (%p701) target = $region56
    $region55: #{baseline_model_forward.1} parent=5 // pred_region
      %s704 = ssub.s32 %s13, 2
      // Predicated region
      $region57: #{baseline_model_forward.1} parent=55 // pred_check
        %p705 = pneg %p194
      $region58: #{baseline_model_forward.1} parent=55 // pred_check_branch
        %707 = sbr.rel (%p705) target = $region60
      $region59: #{baseline_model_forward.1} parent=55 // pred_region
        %s708 = smul.u32 3, %s19
        %p709 = scmp.lt.s32.totalorder %s708, 5
        %s710 = scalar_select %p709, %s708, 5
        %s711 = smul.addr %s710, 8
        %s712 = scalar_lea.vmem %s7, %s711
      $region60: #{baseline_model_forward.1} parent=55 // pred_fallthru
        _
    $region56: #{baseline_model_forward.1} parent=5 // pred_fallthru
      _
  $region6: #{baseline_model_forward.1} parent=0 // loop_footer
    %s17 = sadd.s32 1, %s13
  $region7: #{baseline_model_forward.1} parent=0 // loop_footer_branch
    %12 = sbr.rel target = $region3
  $region8: #{baseline_model_forward.1} parent=0 // loop_exit
    _

</llo_original>
